<compile_context>
chip_gen: v7x
topology: tpu7x:2x2x1
jax: 0.10.0
libtpu: 0.0.40
codegen_flags: <defaults>
</compile_context>

<pallas_src>
import functools

import jax
import jax.numpy as jnp
from jax.experimental import pallas as pl
from jax.experimental.pallas import tpu as pltpu

LANE = 128
SUBLANE = 8
_MAX_BLOCK_BYTES = 8 * 1024 * 1024       # per-input per-step ceiling (4-8 MiB sweet spot)
_DEFAULT_VMEM_CAP = 128 * 1024 * 1024    # v5e / v6e


def _vmem_capacity_bytes():
    try:
        info = pltpu.get_tpu_info()
        cap = int(getattr(info, "vmem_capacity_bytes", 0))
        if cap > 0:
            return cap
    except Exception:
        pass
    return _DEFAULT_VMEM_CAP


def _num_tensorcores():
    # Crude generation sniff: only v7x has 2 TensorCores per chip.
    try:
        kind = str(getattr(jax.devices()[0], "device_kind", "")).lower()
    except Exception:
        kind = ""
    return 2 if "7" in kind else 1


def _block_budget():
    """(per-input block bytes, scoped-VMEM limit) sized for this chip generation."""
    vmem_cap = _vmem_capacity_bytes()
    vmem_limit = min(vmem_cap // 2, 64 * 1024 * 1024)   # 64 MiB on v5e/v6e, 32 MiB on v7x
    # 2 inputs x 2 pipeline buffers (+ small output / Mosaic internal scratch).
    block_bytes = min(_MAX_BLOCK_BYTES,
                      max(512 * 1024, (vmem_limit - (2 << 20)) // 4))
    return block_bytes, vmem_limit


def _l1_sum_kernel(pred_ref, tgt_ref, out_ref, *, tile_rows, valid_rows,
                   blocks_per_slab, may_have_tail):
    """Per-slab partial sum of |pred - target| accumulated into out_ref."""
    p = pl.program_id(0)
    s = pl.program_id(1)

    @pl.when(s == 0)
    def _():
        out_ref[...] = jnp.zeros_like(out_ref)

    # Native-dtype load (minimal HBM traffic), f32 math / accumulation.
    vals = jnp.abs(pred_ref[...].astype(jnp.float32) -
                   tgt_ref[...].astype(jnp.float32))

    def _accumulate(v):
        if tile_rows % SUBLANE == 0:
            # Pure per-(sublane, lane) vreg adds; no cross-lane traffic.
            out_ref[...] += jnp.sum(
                v.reshape(tile_rows // SUBLANE, SUBLANE, LANE), axis=0)
        else:
            # Only possible for a single tiny (rows < multiple-of-8) block.
            out_ref[...] += jnp.sum(v, axis=0, keepdims=True)

    if may_have_tail:
        # Logical (unclamped) row offset of this block; blocks past the true
        # extent (partial tail / redundant clamped block) take the masked path.
        row_start = (p * blocks_per_slab + s) * tile_rows
        is_full = row_start + tile_rows <= valid_rows

        @pl.when(is_full)
        def _():
            _accumulate(vals)

        @pl.when(jnp.logical_not(is_full))
        def _():
            local = jax.lax.broadcasted_iota(jnp.int32, (tile_rows, 1), 0)
            _accumulate(jnp.where(row_start + local < valid_rows, vals, 0.0))
    else:
        _accumulate(vals)


def _l1_abs_sum(pred2d, tgt2d):
    """sum(|pred2d - tgt2d|) for lane-dense (rows, 128) slabs, via Pallas."""
    rows, cols = pred2d.shape
    assert cols == LANE
    itemsize = pred2d.dtype.itemsize

    block_bytes, vmem_limit = _block_budget()
    # Biggest row-tile within the per-block byte budget (multiple of 8).
    target_rows = max(SUBLANE,
                      (block_bytes // (LANE * itemsize)) // SUBLANE * SUBLANE)
    tile_rows = rows if rows <= target_rows else target_rows
    total_blocks = pl.cdiv(rows, tile_rows)

    # 2-way slab split only on 2-TensorCore chips (v7x); on 1-TC chips it
    # would only add a redundant clamped block + per-step masking.
    num_slabs = 2 if (_num_tensorcores() >= 2 and total_blocks >= 2) else 1
    blocks_per_slab = pl.cdiv(total_blocks, num_slabs)
    has_redundant = num_slabs * blocks_per_slab != total_blocks
    may_have_tail = (rows % tile_rows != 0) or has_redundant
    acc_rows = SUBLANE if tile_rows % SUBLANE == 0 else 1

    def in_index_map(p, s):
        blk = p * blocks_per_slab + s
        if has_redundant:
            # Clamp redundant trailing blocks (their rows are masked to 0).
            blk = jnp.minimum(blk, total_blocks - 1)
        return (blk, 0)

    if num_slabs >= 2:
        lead_sem = getattr(pltpu, "CORE_PARALLEL", pltpu.PARALLEL)
    else:
        lead_sem = pltpu.PARALLEL

    kernel = functools.partial(
        _l1_sum_kernel,
        tile_rows=tile_rows,
        valid_rows=rows,
        blocks_per_slab=blocks_per_slab,
        may_have_tail=may_have_tail,
    )

    partials = pl.pallas_call(
        kernel,
        out_shape=jax.ShapeDtypeStruct((num_slabs * acc_rows, LANE), jnp.float32),
        grid_spec=pltpu.PrefetchScalarGridSpec(
            num_scalar_prefetch=0,
            grid=(num_slabs, blocks_per_slab),
            in_specs=[
                pl.BlockSpec((tile_rows, LANE), in_index_map),
                pl.BlockSpec((tile_rows, LANE), in_index_map),
            ],
            # Output block depends only on the slab index -> stays resident
            # across the reduction axis and doubles as the accumulator.
            out_specs=pl.BlockSpec((acc_rows, LANE), lambda p, s: (p, 0)),
        ),
        compiler_params=pltpu.CompilerParams(
            dimension_semantics=(lead_sem, pltpu.ARBITRARY),
            vmem_limit_bytes=vmem_limit,
        ),
        cost_estimate=pl.CostEstimate(
            flops=3 * rows * LANE,
            transcendentals=0,
            bytes_accessed=2 * rows * LANE * itemsize
            + num_slabs * acc_rows * LANE * 4,
        ),
    )(pred2d, tgt2d)

    # Tiny final cross-lane / cross-slab collapse outside the kernel.
    return jnp.sum(partials)


@functools.partial(jax.jit, static_argnames=("loss_weight", "reduction"))
def l1_loss(pred, target, loss_weight=1.0, reduction="mean"):
    """Matches torch.nn.functional.l1_loss(pred, target) * loss_weight."""
    assert pred.shape == target.shape
    n_elem = pred.size

    if reduction == "none":
        # TODO(synk): 'none' reduction is not used by the module's forward();
        # kept as plain-JAX elementwise |pred - target| in the input dtype.
        return loss_weight * jnp.abs(pred - target)

    flat_p = pred.reshape(-1)
    flat_t = target.reshape(-1)

    rows = n_elem // LANE
    main = rows * LANE

    total = jnp.float32(0.0)
    if rows > 0:
        # Free reshape when n_elem % 128 == 0 (the common case: no HBM copy).
        total = total + _l1_abs_sum(flat_p[:main].reshape(rows, LANE),
                                    flat_t[:main].reshape(rows, LANE))
    if main < n_elem:
        # Sub-row (<128 element) ragged tail: tiny plain-JAX sum instead of
        # padding (copying) both full tensors in HBM.
        total = total + jnp.sum(jnp.abs(flat_p[main:].astype(jnp.float32) -
                                        flat_t[main:].astype(jnp.float32)))

    if reduction == "mean":
        out = total / jnp.float32(n_elem)
    else:  # "sum"
        out = total
    return jnp.float32(loss_weight) * out


class L1Loss:
    """JAX/Pallas equivalent of the PyTorch L1Loss module."""

    def __init__(self, loss_weight=1.0, reduction="mean"):
        if reduction not in ("none", "mean", "sum"):
            raise ValueError(f"Unsupported reduction mode: {reduction}")
        self.loss_weight = float(loss_weight)
        self.reduction = reduction

    def __call__(self, pred, target, weight=None, **kwargs):
        # Matches the reference forward(): `weight` is ignored and F.l1_loss's
        # default reduction ('mean') is used regardless of self.reduction.
        return l1_loss(pred, target, loss_weight=self.loss_weight,
                       reduction="mean")


if __name__ == "__main__":
    key = jax.random.PRNGKey(0)
    k1, k2, k3, k4 = jax.random.split(key, 4)

    # Main check: (N, C, H, W) = (2, 4, 16, 16), element count % 128 == 0.
    N, C, H, W = 2, 4, 16, 16
    pred = jax.random.normal(k1, (N, C, H, W), dtype=jnp.float32)
    target = jax.random.normal(k2, (N, C, H, W), dtype=jnp.float32)

    loss_mod = L1Loss(loss_weight=1.0, reduction="mean")
    out = jax.block_until_ready(loss_mod(pred, target))
    ref = jnp.mean(jnp.abs(pred - target))
    assert jnp.allclose(out, ref, rtol=1e-5, atol=1e-6), (out, ref)

    # Ragged check: element count not a multiple of 128 (exercises tail path).
    pred_r = jax.random.normal(k3, (3, 5, 7, 11), dtype=jnp.float32)
    target_r = jax.random.normal(k4, (3, 5, 7, 11), dtype=jnp.float32)
    out_r = jax.block_until_ready(loss_mod(pred_r, target_r))
    ref_r = jnp.mean(jnp.abs(pred_r - target_r))
    assert jnp.allclose(out_r, ref_r, rtol=1e-5, atol=1e-6), (out_r, ref_r)

    print("KERNEL_OK")
</pallas_src>

<mosaic_0001>
module attributes {stable_mosaic.version = 11 : i64} {
  func.func @_l1_sum_kernel(%arg0: i32, %arg1: i32, %arg2: memref<16x128xf32, #tpu.memory_space<vmem>>, %arg3: memref<16x128xf32, #tpu.memory_space<vmem>>, %arg4: memref<8x128xf32, #tpu.memory_space<vmem>>) attributes {dimension_semantics = [#tpu.dimension_semantics<parallel>, #tpu.dimension_semantics<arbitrary>], iteration_bounds = array<i64: 1, 1>, scalar_prefetch = 0 : i64, scratch_operands = 0 : i64, tpu.core_type = #tpu.core_type<tc>, window_params = [{transform_indices = @transform_0, window_bounds = array<i64: 16, 128>}, {transform_indices = @transform_1, window_bounds = array<i64: 16, 128>}, {transform_indices = @transform_2, window_bounds = array<i64: 8, 128>}]} {
    %c0_i32 = arith.constant 0 : i32
    %0 = arith.cmpi eq, %arg1, %c0_i32 : i32
    %1 = arith.extui %0 : i1 to i32
    %c0_i32_0 = arith.constant 0 : i32
    %2 = arith.cmpi ne, %1, %c0_i32_0 : i32
    scf.if %2 {
      %cst_8 = arith.constant 0.000000e+00 : f32
      %12 = vector.broadcast %cst_8 : f32 to vector<8x128xf32>
      %c0_9 = arith.constant 0 : index
      %c0_10 = arith.constant 0 : index
      %13 = vector.load %arg4[%c0_9, %c0_10] : memref<8x128xf32, #tpu.memory_space<vmem>>, vector<8x128xf32>
      tpu.vector_store %arg4[%c0_9, %c0_10], %12 {strides = array<i32>} : memref<8x128xf32, #tpu.memory_space<vmem>>, vector<8x128xf32>,
    } else {
    }
    %c0 = arith.constant 0 : index
    %c0_1 = arith.constant 0 : index
    %3 = vector.load %arg2[%c0, %c0_1] : memref<16x128xf32, #tpu.memory_space<vmem>>, vector<16x128xf32>
    %c0_2 = arith.constant 0 : index
    %c0_3 = arith.constant 0 : index
    %4 = vector.load %arg3[%c0_2, %c0_3] : memref<16x128xf32, #tpu.memory_space<vmem>>, vector<16x128xf32>
    %5 = arith.subf %3, %4 : vector<16x128xf32>
    %6 = math.absf %5 : vector<16x128xf32>
    %c0_4 = arith.constant 0 : index
    %c0_5 = arith.constant 0 : index
    %7 = vector.load %arg4[%c0_4, %c0_5] : memref<8x128xf32, #tpu.memory_space<vmem>>, vector<8x128xf32>
    %8 = vector.shape_cast %6 : vector<16x128xf32> to vector<2x8x128xf32>
    %cst = arith.constant dense<0.000000e+00> : vector<8x128xf32>
    %9 = vector.multi_reduction <add>, %8, %cst [0] : vector<2x8x128xf32> to vector<8x128xf32>
    %10 = arith.addf %7, %9 : vector<8x128xf32>
    %c0_6 = arith.constant 0 : index
    %c0_7 = arith.constant 0 : index
    %11 = vector.load %arg4[%c0_6, %c0_7] : memref<8x128xf32, #tpu.memory_space<vmem>>, vector<8x128xf32>
    tpu.vector_store %arg4[%c0_6, %c0_7], %10 {strides = array<i32>} : memref<8x128xf32, #tpu.memory_space<vmem>>, vector<8x128xf32>,
    return
  }
  func.func @transform_0(%arg0: i32, %arg1: i32) -> (i32, i32) {
    %c1_i32 = arith.constant 1 : i32
    %0 = arith.muli %arg0, %c1_i32 : i32
    %1 = arith.addi %0, %arg1 : i32
    %c0_i32 = arith.constant 0 : i32
    %c0_i32_0 = arith.constant 0 : i32
    return %1, %c0_i32 : i32, i32
  }
  func.func @transform_1(%arg0: i32, %arg1: i32) -> (i32, i32) {
    %c1_i32 = arith.constant 1 : i32
    %0 = arith.muli %arg0, %c1_i32 : i32
    %1 = arith.addi %0, %arg1 : i32
    %c0_i32 = arith.constant 0 : i32
    %c0_i32_0 = arith.constant 0 : i32
    return %1, %c0_i32 : i32, i32
  }
  func.func @transform_2(%arg0: i32, %arg1: i32) -> (i32, i32) {
    %c0_i32 = arith.constant 0 : i32
    %c0_i32_0 = arith.constant 0 : i32
    return %arg0, %c0_i32 : i32, i32
  }
}

</mosaic_0001>

<llo_original>
// kernel: l1_loss.1
$region0: #{l1_loss.1}
  #allocation0 [shape = 'u32[]', space=smem, size = 0x4, offset = 0x4, fixed_abs, tag = 'smem constant byte address 0x4 - core index']
  #allocation1 [shape = 'u32[144,128]{1,0:T(1,128)}', space=vmem, size = 0x12000, scoped, tag = 'internal scratch']
  %s0 = inlined_call_operand.hbm [shape: f32[16,128], index: 0, kind: input, shape index: {}]
  %s1 = inlined_call_operand.hbm [shape: f32[16,128], index: 1, kind: input, shape index: {}]
  %s2 = inlined_call_operand.hbm [shape: f32[8,128], index: 2, kind: output, shape index: {}]
  %s3 = sld [smem:[#allocation0]]
  $region30: #{l1_loss.1} parent=0
    _
  %s5 = ssub.s32 1, %s3
  %s6 = scalar_select 0, %s5, %s3
  $region1: #{l1_loss.1} parent=0
    #allocation2 [shape = 'u8[8192]{0}', space=vmem, size = 0x2000, scoped, tag = 'input window, operand 0, single buffered']
    #allocation3 [shape = 's32[1]{0}', space=sflag, size = 0x4, scoped, tag = 'scoped memory for l1_loss.1']
    #allocation4 [shape = 's32[1]{0}', space=sflag, size = 0x4, scoped, tag = 'scoped memory for l1_loss.1']
    #allocation5 [shape = 'u8[8192]{0}', space=vmem, size = 0x2000, scoped, tag = 'input window, operand 1, single buffered']
    #allocation6 [shape = 's32[1]{0}', space=sflag, size = 0x4, scoped, tag = 'scoped memory for l1_loss.1']
    #allocation7 [shape = 'u8[4096]{0}', space=vmem, size = 0x1000, scoped, tag = 'output window, operand 0, single buffered']
    %7 = vsyncpa [#allocation3], 0
    %8 = vsyncpa [#allocation6], 0
    %9 = vsyncpa [#allocation4], 0
    // Predicated region
    $region2: #{l1_loss.1} parent=1 // pred_check
      _
    $region3: #{l1_loss.1} parent=1 // pred_check_branch
      %11 = sbr.rel (0) target = $region5
    $region4: #{l1_loss.1} parent=1 // pred_region
      %s12 = sadd.s32 0, 0
      %s13 = smul.u32 2, %s12
      %s15 = ssub.s32 256, 256
      %16 = vsyncadd [#allocation3], %s15
      %s17 = smul.addr %s13, 128
      %s18 = scalar_lea.hbm %s0, %s17
      %s19 = sshll.u32 [#allocation2], 4
      %s20 = int_to_ptr.vmem [resolvable:$true] %s19
      %25 = dma.hbm_to_vmem [thread:$0]  %s18, 256, %s20, [#allocation3], 128, 128, 8
    $region5: #{l1_loss.1} parent=1 // pred_fallthru
      _
    // Predicated region
    $region6: #{l1_loss.1} parent=1 // pred_check
      _
    $region7: #{l1_loss.1} parent=1 // pred_check_branch
      %27 = sbr.rel (0) target = $region9
    $region8: #{l1_loss.1} parent=1 // pred_region
      %s28 = sadd.s32 0, 0
      %s29 = smul.u32 2, %s28
      %s31 = ssub.s32 256, 256
      %32 = vsyncadd [#allocation6], %s31
      %s33 = smul.addr %s29, 128
      %s34 = scalar_lea.hbm %s1, %s33
      %s35 = sshll.u32 [#allocation5], 4
      %s36 = int_to_ptr.vmem [resolvable:$true] %s35
      %41 = dma.hbm_to_vmem [thread:$0]  %s34, 256, %s36, [#allocation6], 128, 128, 8
    $region9: #{l1_loss.1} parent=1 // pred_fallthru
      _
    // Predicated region
    $region10: #{l1_loss.1} parent=1 // pred_check
      _
    $region11: #{l1_loss.1} parent=1 // pred_check_branch
      %43 = sbr.rel (0) target = $region13
    $region12: #{l1_loss.1} parent=1 // pred_region
      %44 = dma.done [#allocation3], 256
    $region13: #{l1_loss.1} parent=1 // pred_fallthru
      _
    // Predicated region
    $region14: #{l1_loss.1} parent=1 // pred_check
      _
    $region15: #{l1_loss.1} parent=1 // pred_check_branch
      %46 = sbr.rel (0) target = $region17
    $region16: #{l1_loss.1} parent=1 // pred_region
      %47 = dma.done [#allocation6], 256
    $region17: #{l1_loss.1} parent=1 // pred_fallthru
      _
    %s48 = sadd.s32 0, 0
    %s49 = smul.u32 2, %s48
    %s50 = sadd.s32 0, 0
    %s51 = smul.u32 2, %s50
    %p52 = scmp.eq.s32.totalorder 0, 0
    // Predicated region
    $region18: #{l1_loss.1} parent=1 // pred_check
      %p53 = pneg %p52
    $region19: #{l1_loss.1} parent=1 // pred_check_branch
      %55 = sbr.rel (%p53) target = $region21
    $region20: #{l1_loss.1} parent=1 // pred_region
      %56 = vst [vmem:[#allocation7] sm:$0xff] 0.0
    $region21: #{l1_loss.1} parent=1 // pred_fallthru
      _
    %v57 = vld [vmem:[#allocation2] sm:$0xff]
    %v58 = vld [vmem:[#allocation2 + $0x8] sm:$0xff]
    %v59 = vld [vmem:[#allocation5] sm:$0xff]
    %v60 = vld [vmem:[#allocation5 + $0x8] sm:$0xff]
    %v61 = vsub.f32 %v57, %v59
    %v62 = vsub.f32 %v58, %v60
    %v63 = vand.u32 2147483647, %v61
    %v64 = vand.u32 2147483647, %v62
    %v65 = vld [vmem:[#allocation7] sm:$0xff]
    %v66 = vadd.f32 %v63, %v64
    %v67 = vadd.f32 %v65, %v66
    %68 = vst [vmem:[#allocation7] sm:$0xff] %v67
    // Predicated region
    $region22: #{l1_loss.1} parent=1 // pred_check
      _
    $region23: #{l1_loss.1} parent=1 // pred_check_branch
      %70 = sbr.rel (0) target = $region25
    $region24: #{l1_loss.1} parent=1 // pred_region
      %s72 = ssub.s32 128, 128
      %73 = vsyncadd [#allocation4], %s72
      %s75 = sshll.u32 [#allocation7], 4
      %s76 = int_to_ptr.vmem [resolvable:$true] %s75
      %78 = dma.vmem_to_hbm [thread:$0]  %s76, 128, %s2, [#allocation4]
    $region25: #{l1_loss.1} parent=1 // pred_fallthru
      _
    // Predicated region
    $region26: #{l1_loss.1} parent=1 // pred_check
      _
    $region27: #{l1_loss.1} parent=1 // pred_check_branch
      %80 = sbr.rel (0) target = $region29
    $region28: #{l1_loss.1} parent=1 // pred_region
      %81 = dma.done [#allocation4], 128
    $region29: #{l1_loss.1} parent=1 // pred_fallthru
      _
    %82 = vsyncpa [#allocation3], 1
    %83 = vsyncpa [#allocation6], 1
    %84 = vsyncpa [#allocation4], 1

</llo_original>
